<compile_context>
chip_gen: v6e
topology: v6e:2x2x1
jax: 0.10.0
libtpu: 0.0.40
codegen_flags: <defaults>
</compile_context>

<pallas_src>
import functools

import jax
import jax.numpy as jnp
from jax import lax
from jax.experimental import pallas as pl
from jax.experimental.pallas import tpu as pltpu


def _cdiv(a, b):
    return -(-a // b)


def _round_up(x, m):
    return ((x + m - 1) // m) * m


def _smape_kernel(f_ref, t_ref, m_ref, out_ref, acc_ref, *,
                  n_rows, n_cols, row_blocks_per_part, tile_rows, tile_cols,
                  need_row_mask, need_col_mask):
    r = pl.program_id(1)
    c = pl.program_id(2)

    @pl.when(jnp.logical_and(r == 0, c == 0))
    def _():
        acc_ref[...] = jnp.zeros_like(acc_ref)

    f = f_ref[...].astype(jnp.float32)
    t = t_ref[...].astype(jnp.float32)
    m = m_ref[...].astype(jnp.float32)

    num = jnp.abs(f - t)
    den = jnp.abs(f) + jnp.abs(t)

    # divide_no_nan: num == 0 wherever den == 0 (both non-negative and
    # num <= den), so substituting den = 1 there yields exactly 0.
    # Approx reciprocal runs on the otherwise idle EUP slot (frees the VALU on
    # v7x); one Newton-Raphson step restores ~f32 accuracy.
    den_safe = jnp.where(den == 0.0, 1.0, den)
    r_apx = pl.reciprocal(den_safe, approx=True)
    r_ref = r_apx * (2.0 - den_safe * r_apx)
    ratio = num * r_ref
    # torch divide_no_nan also zeroes NaN / +Inf results (non-finite inputs);
    # NaN < inf is False, so both cases select 0 here.
    ratio = jnp.where(ratio < jnp.inf, ratio, 0.0)

    contrib = ratio * m

    # Tail masking (only traced when the tiles don't evenly cover the array).
    # Boundary blocks read unspecified data past the array edge; a select (not
    # a multiply) guarantees garbage NaN/Inf can't leak into the sum.
    if need_row_mask or need_col_mask:
        valid = None
        if need_row_mask:
            p = pl.program_id(0)
            row0 = (p * row_blocks_per_part + r) * tile_rows
            rid = row0 + lax.broadcasted_iota(jnp.int32, (tile_rows, tile_cols), 0)
            valid = rid < n_rows
        if need_col_mask:
            col0 = c * tile_cols
            cid = col0 + lax.broadcasted_iota(jnp.int32, (tile_rows, tile_cols), 1)
            cmask = cid < n_cols
            valid = cmask if valid is None else jnp.logical_and(valid, cmask)
        contrib = jnp.where(valid, contrib, 0.0)

    # VPU-only fold of the tile rows into the resident accumulator
    # (sublane-aligned reshape, no cross-lane movement).
    if tile_rows % 8 == 0:
        acc_ref[...] += jnp.sum(contrib.reshape(tile_rows // 8, 8, tile_cols), axis=0)
    else:
        # Only reachable when tile_rows == n_rows (full-dim block, tiny batch).
        acc_ref[...] += contrib

    @pl.when(jnp.logical_and(r == pl.num_programs(1) - 1,
                             c == pl.num_programs(2) - 1))
    def _():
        # One XLU reduce per part, single (1, 1) store.
        out_ref[...] = jnp.sum(acc_ref[...]).reshape(1, 1)


def smape_loss(insample, freq, forecast, target, mask, *,
               num_parts=1,                 # set 2 on v7x (2 TensorCores/chip)
               max_tile_rows=512,
               max_tile_cols=2048,
               block_elems_budget=1 << 20,  # ~4 MiB/input block at f32
               vmem_limit_bytes=32 * 1024 * 1024):
    """Matches smape_loss.forward(insample, freq, forecast, target, mask).

    `insample` and `freq` are unused, exactly as in the PyTorch module."""
    del insample, freq
    assert forecast.shape == target.shape == mask.shape

    # Collapse any leading dims to 2-D (batch, time).  Collapsing major dims
    # preserves layout, so this is metadata-only (no HBM copy) — unlike the
    # old padded-slab path.
    if forecast.ndim != 2:
        last = forecast.shape[-1] if forecast.ndim >= 1 else 1
        forecast = forecast.reshape(-1, last)
        target = target.reshape(-1, last)
        mask = mask.reshape(-1, last)

    n_rows, n_cols = forecast.shape
    n = n_rows * n_cols

    # Sublane multiple required by the narrowest input dtype:
    # 8 (4-byte) / 16 (2-byte) / 32 (1-byte).
    sub = 8
    for a in (forecast, target, mask):
        sub = max(sub, 8 * max(1, 4 // a.dtype.itemsize))

    # --- column (lane) tiling ------------------------------------------------
    if n_cols <= max_tile_cols:
        tile_cols, jc = n_cols, 1            # full-dim block: always legal
    else:
        tile_cols = max_tile_cols            # multiple of 128
        jc = _cdiv(n_cols, tile_cols)
    need_col_mask = (jc * tile_cols != n_cols)

    # --- row (sublane) tiling ------------------------------------------------
    rows_cap = min(max_tile_rows, block_elems_budget // max(tile_cols, 1))
    rows_cap = max(sub, (rows_cap // sub) * sub)
    rows_per_part = _cdiv(n_rows, num_parts)
    if num_parts == 1 and n_rows <= rows_cap:
        tile_rows, jr = n_rows, 1            # full-dim block, no row mask
    else:
        tile_rows = min(rows_cap, _round_up(rows_per_part, sub))
        jr = _cdiv(n_rows, num_parts * tile_rows)
    need_row_mask = (num_parts * jr * tile_rows != n_rows)

    acc_rows = 8 if tile_rows % 8 == 0 else tile_rows

    kernel = functools.partial(
        _smape_kernel,
        n_rows=n_rows, n_cols=n_cols, row_blocks_per_part=jr,
        tile_rows=tile_rows, tile_cols=tile_cols,
        need_row_mask=need_row_mask, need_col_mask=need_col_mask)

    # TODO(synk): optional pipeline_mode=pl.Buffered(3) sweep once per-step
    # DMA time shrinks on v7x; default double-buffering is used here.
    in_spec = pl.BlockSpec((tile_rows, tile_cols),
                           lambda p, r, c: (p * jr + r, c))

    # Plain "parallel"/"arbitrary" tags don't change codegen; only
    # CORE_PARALLEL shards the leading axis across TensorCores (v7x).
    lead_sem = pltpu.CORE_PARALLEL if num_parts > 1 else "arbitrary"

    in_bytes = forecast.nbytes + target.nbytes + mask.nbytes

    partials = pl.pallas_call(
        kernel,
        out_shape=jax.ShapeDtypeStruct((num_parts, 1), jnp.float32),
        grid_spec=pltpu.PrefetchScalarGridSpec(
            num_scalar_prefetch=0,
            grid=(num_parts, jr, jc),
            in_specs=[in_spec, in_spec, in_spec],
            out_specs=pl.BlockSpec((1, 1), lambda p, r, c: (p, 0)),
            scratch_shapes=[pltpu.VMEM((acc_rows, tile_cols), jnp.float32)],
        ),
        compiler_params=pltpu.CompilerParams(
            dimension_semantics=(lead_sem, "arbitrary", "arbitrary"),
            vmem_limit_bytes=vmem_limit_bytes,
        ),
        cost_estimate=pl.CostEstimate(
            flops=10 * n,
            transcendentals=n,
            bytes_accessed=int(in_bytes) + 4 * num_parts,
        ),
    )(forecast, target, mask)

    # Division by the true element count B*T matches torch.mean() semantics
    # (tail-masked / out-of-range tile elements contribute exactly 0).
    return 200.0 * jnp.sum(partials) / n


if __name__ == "__main__":
    key = jax.random.PRNGKey(0)
    k1, k2, k3 = jax.random.split(key, 3)

    def ref_loss(f, t, m):
        num = jnp.abs(f - t)
        den = jnp.abs(f) + jnp.abs(t)
        return 200.0 * jnp.mean(jnp.where(den == 0.0, 0.0, num / den) * m)

    # --- test 1: plain path (full-dim blocks, no tail masks) ---------------
    B, T = 4, 128  # batch, time
    forecast = jax.random.normal(k1, (B, T), dtype=jnp.float32)
    target = jax.random.normal(k2, (B, T), dtype=jnp.float32)
    mask = (jax.random.uniform(k3, (B, T)) > 0.2).astype(jnp.float32)

    # Exercise the divide_no_nan path: forecast == target == 0 at some positions.
    forecast = forecast.at[0, :8].set(0.0)
    target = target.at[0, :8].set(0.0)

    insample = jnp.zeros((B, 32), dtype=jnp.float32)  # unused by the loss
    freq = 1                                          # unused by the loss

    loss = jax.block_until_ready(smape_loss(insample, freq, forecast, target, mask))
    ref = ref_loss(forecast, target, mask)
    assert jnp.allclose(loss, ref, rtol=1e-5, atol=1e-6), (loss, ref)

    # --- test 2: non-dividing shapes force the in-kernel iota tail masks ---
    k4, k5, k6 = jax.random.split(jax.random.PRNGKey(1), 3)
    B2, T2 = 10, 200
    f2 = jax.random.normal(k4, (B2, T2), dtype=jnp.float32)
    t2 = jax.random.normal(k5, (B2, T2), dtype=jnp.float32)
    m2 = (jax.random.uniform(k6, (B2, T2)) > 0.5).astype(jnp.float32)

    loss2 = jax.block_until_ready(
        smape_loss(insample, freq, f2, t2, m2, max_tile_rows=8, max_tile_cols=128))
    ref2 = ref_loss(f2, t2, m2)
    assert jnp.allclose(loss2, ref2, rtol=1e-5, atol=1e-6), (loss2, ref2)

    print("KERNEL_OK")
</pallas_src>

<mosaic_0001>
module attributes {stable_mosaic.version = 11 : i64} {
  func.func @_smape_kernel(%arg0: i32, %arg1: i32, %arg2: i32, %arg3: memref<4x128xf32, #tpu.memory_space<vmem>>, %arg4: memref<4x128xf32, #tpu.memory_space<vmem>>, %arg5: memref<4x128xf32, #tpu.memory_space<vmem>>, %arg6: memref<1x1xf32, #tpu.memory_space<vmem>>, %arg7: memref<4x128xf32, #tpu.memory_space<vmem>>) attributes {dimension_semantics = [#tpu.dimension_semantics<arbitrary>, #tpu.dimension_semantics<arbitrary>, #tpu.dimension_semantics<arbitrary>], iteration_bounds = array<i64: 1, 1, 1>, scalar_prefetch = 0 : i64, scratch_operands = 1 : i64, tpu.core_type = #tpu.core_type<tc>, window_params = [{transform_indices = @transform_0, window_bounds = array<i64: 4, 128>}, {transform_indices = @transform_1, window_bounds = array<i64: 4, 128>}, {transform_indices = @transform_2, window_bounds = array<i64: 4, 128>}, {transform_indices = @transform_3, window_bounds = array<i64: 1, 1>}]} {
    %c0_i32 = arith.constant 0 : i32
    %0 = arith.cmpi eq, %arg1, %c0_i32 : i32
    %c0_i32_0 = arith.constant 0 : i32
    %1 = arith.cmpi eq, %arg2, %c0_i32_0 : i32
    %2 = arith.andi %0, %1 : i1
    %3 = arith.extui %2 : i1 to i32
    %c0_i32_1 = arith.constant 0 : i32
    %4 = arith.cmpi ne, %3, %c0_i32_1 : i32
    scf.if %4 {
      %cst_18 = arith.constant 0.000000e+00 : f32
      %36 = vector.broadcast %cst_18 : f32 to vector<4x128xf32>
      %c0_19 = arith.constant 0 : index
      %c0_20 = arith.constant 0 : index
      %37 = vector.load %arg7[%c0_19, %c0_20] : memref<4x128xf32, #tpu.memory_space<vmem>>, vector<4x128xf32>
      tpu.vector_store %arg7[%c0_19, %c0_20], %36 {strides = array<i32>} : memref<4x128xf32, #tpu.memory_space<vmem>>, vector<4x128xf32>,
    } else {
    }
    %c0 = arith.constant 0 : index
    %c0_2 = arith.constant 0 : index
    %5 = vector.load %arg3[%c0, %c0_2] : memref<4x128xf32, #tpu.memory_space<vmem>>, vector<4x128xf32>
    %c0_3 = arith.constant 0 : index
    %c0_4 = arith.constant 0 : index
    %6 = vector.load %arg4[%c0_3, %c0_4] : memref<4x128xf32, #tpu.memory_space<vmem>>, vector<4x128xf32>
    %c0_5 = arith.constant 0 : index
    %c0_6 = arith.constant 0 : index
    %7 = vector.load %arg5[%c0_5, %c0_6] : memref<4x128xf32, #tpu.memory_space<vmem>>, vector<4x128xf32>
    %8 = arith.subf %5, %6 : vector<4x128xf32>
    %9 = math.absf %8 : vector<4x128xf32>
    %10 = math.absf %5 : vector<4x128xf32>
    %11 = math.absf %6 : vector<4x128xf32>
    %12 = arith.addf %10, %11 : vector<4x128xf32>
    %cst = arith.constant 0.000000e+00 : f32
    %13 = vector.broadcast %cst : f32 to vector<4x128xf32>
    %14 = arith.cmpf oeq, %12, %13 : vector<4x128xf32>
    %cst_7 = arith.constant 1.000000e+00 : f32
    %15 = vector.broadcast %cst_7 : f32 to vector<4x128xf32>
    %16 = arith.select %14, %15, %12 : vector<4x128xi1>, vector<4x128xf32>
    %17 = tpu.reciprocal %16 {approx = true} : vector<4x128xf32> -> vector<4x128xf32>
    %18 = arith.mulf %16, %17 : vector<4x128xf32>
    %cst_8 = arith.constant 2.000000e+00 : f32
    %19 = vector.broadcast %cst_8 : f32 to vector<4x128xf32>
    %20 = arith.subf %19, %18 : vector<4x128xf32>
    %21 = arith.mulf %17, %20 : vector<4x128xf32>
    %22 = arith.mulf %9, %21 : vector<4x128xf32>
    %cst_9 = arith.constant 0x7F800000 : f32
    %23 = vector.broadcast %cst_9 : f32 to vector<4x128xf32>
    %24 = arith.cmpf olt, %22, %23 : vector<4x128xf32>
    %cst_10 = arith.constant 0.000000e+00 : f32
    %25 = vector.broadcast %cst_10 : f32 to vector<4x128xf32>
    %26 = arith.select %24, %22, %25 : vector<4x128xi1>, vector<4x128xf32>
    %27 = arith.mulf %26, %7 : vector<4x128xf32>
    %c0_11 = arith.constant 0 : index
    %c0_12 = arith.constant 0 : index
    %28 = vector.load %arg7[%c0_11, %c0_12] : memref<4x128xf32, #tpu.memory_space<vmem>>, vector<4x128xf32>
    %29 = arith.addf %28, %27 : vector<4x128xf32>
    %c0_13 = arith.constant 0 : index
    %c0_14 = arith.constant 0 : index
    %30 = vector.load %arg7[%c0_13, %c0_14] : memref<4x128xf32, #tpu.memory_space<vmem>>, vector<4x128xf32>
    tpu.vector_store %arg7[%c0_13, %c0_14], %29 {strides = array<i32>} : memref<4x128xf32, #tpu.memory_space<vmem>>, vector<4x128xf32>,
    %c0_i32_15 = arith.constant 0 : i32
    %31 = arith.cmpi eq, %arg1, %c0_i32_15 : i32
    %c0_i32_16 = arith.constant 0 : i32
    %32 = arith.cmpi eq, %arg2, %c0_i32_16 : i32
    %33 = arith.andi %31, %32 : i1
    %34 = arith.extui %33 : i1 to i32
    %c0_i32_17 = arith.constant 0 : i32
    %35 = arith.cmpi ne, %34, %c0_i32_17 : i32
    scf.if %35 {
      %c0_18 = arith.constant 0 : index
      %c0_19 = arith.constant 0 : index
      %36 = vector.load %arg7[%c0_18, %c0_19] : memref<4x128xf32, #tpu.memory_space<vmem>>, vector<4x128xf32>
      %37 = vector.shape_cast %36 : vector<4x128xf32> to vector<1x4x128xf32>
      %cst_20 = arith.constant dense<0.000000e+00> : vector<1xf32>
      %38 = vector.multi_reduction <add>, %37, %cst_20 [1, 2] : vector<1x4x128xf32> to vector<1xf32>
      %39 = vector.shape_cast %38 : vector<1xf32> to vector<1x1x1xf32>
      %40 = vector.extract %39[0, 0, 0] : f32 from vector<1x1x1xf32>
      %41 = vector.broadcast %40 : f32 to vector<1x1xf32>
      %c0_21 = arith.constant 0 : index
      %c0_22 = arith.constant 0 : index
      %42 = vector.load %arg6[%c0_21, %c0_22] : memref<1x1xf32, #tpu.memory_space<vmem>>, vector<1x1xf32>
      tpu.vector_store %arg6[%c0_21, %c0_22], %41 {strides = array<i32>} : memref<1x1xf32, #tpu.memory_space<vmem>>, vector<1x1xf32>,
    } else {
    }
    return
  }
  func.func @transform_0(%arg0: i32, %arg1: i32, %arg2: i32) -> (i32, i32) {
    %c1_i32 = arith.constant 1 : i32
    %0 = arith.muli %arg0, %c1_i32 : i32
    %1 = arith.addi %0, %arg1 : i32
    %c0_i32 = arith.constant 0 : i32
    return %1, %arg2 : i32, i32
  }
  func.func @transform_1(%arg0: i32, %arg1: i32, %arg2: i32) -> (i32, i32) {
    %c1_i32 = arith.constant 1 : i32
    %0 = arith.muli %arg0, %c1_i32 : i32
    %1 = arith.addi %0, %arg1 : i32
    %c0_i32 = arith.constant 0 : i32
    return %1, %arg2 : i32, i32
  }
  func.func @transform_2(%arg0: i32, %arg1: i32, %arg2: i32) -> (i32, i32) {
    %c1_i32 = arith.constant 1 : i32
    %0 = arith.muli %arg0, %c1_i32 : i32
    %1 = arith.addi %0, %arg1 : i32
    %c0_i32 = arith.constant 0 : i32
    return %1, %arg2 : i32, i32
  }
  func.func @transform_3(%arg0: i32, %arg1: i32, %arg2: i32) -> (i32, i32) {
    %c0_i32 = arith.constant 0 : i32
    %c0_i32_0 = arith.constant 0 : i32
    return %arg0, %c0_i32 : i32, i32
  }
}

</mosaic_0001>

<llo_original>
// kernel: tpu_custom_call.1
$region0: #{tpu_custom_call.1}
  #allocation0 [shape = 'u32[]', space=smem, size = 0x4, offset = 0x4, fixed_abs, tag = 'smem constant byte address 0x4 - core index']
  #allocation1 [shape = 'u32[144,128]{1,0:T(1,128)}', space=vmem, size = 0x12000, scoped, tag = 'internal scratch']
  #allocation2 [shape = 'f32[4,128]{1,0:T(4,128)}', space=vmem, size = 0x800, scoped, tag = 'scratch operand']
  %s0 = inlined_call_operand.hbm [shape: f32[4,128], index: 0, kind: input, shape index: {}]
  %s1 = inlined_call_operand.hbm [shape: f32[4,128], index: 1, kind: input, shape index: {}]
  %s2 = inlined_call_operand.hbm [shape: f32[4,128], index: 2, kind: input, shape index: {}]
  %s3 = inlined_call_operand.hbm [shape: f32[1,1], index: 3, kind: output, shape index: {}]
  %s4 = sld [smem:[#allocation0]]
  $region42: #{tpu_custom_call.1} parent=0
    _
  %s6 = ssub.s32 1, %s4
  %s7 = scalar_select 0, %s6, %s4
  $region1: #{tpu_custom_call.1} parent=0
    #allocation3 [shape = 'u8[2048]{0}', space=vmem, size = 0x800, scoped, tag = 'input window, operand 0, single buffered']
    #allocation4 [shape = 's32[1]{0}', space=sflag, size = 0x4, scoped, tag = 'scoped memory for tpu_custom_call.1']
    #allocation5 [shape = 's32[1]{0}', space=sflag, size = 0x4, scoped, tag = 'scoped memory for tpu_custom_call.1']
    #allocation6 [shape = 'u8[2048]{0}', space=vmem, size = 0x800, scoped, tag = 'input window, operand 1, single buffered']
    #allocation7 [shape = 's32[1]{0}', space=sflag, size = 0x4, scoped, tag = 'scoped memory for tpu_custom_call.1']
    #allocation8 [shape = 'u8[2048]{0}', space=vmem, size = 0x800, scoped, tag = 'input window, operand 2, single buffered']
    #allocation9 [shape = 'u8[512]{0}', space=vmem, size = 0x400, scoped, tag = 'output window, operand 0, single buffered']
    %8 = vsyncpa [#allocation4], 0
    %9 = vsyncpa [#allocation7], 0
    %10 = vsyncpa [#allocation5], 0
    // Predicated region
    $region2: #{tpu_custom_call.1} parent=1 // pred_check
      _
    $region3: #{tpu_custom_call.1} parent=1 // pred_check_branch
      %12 = sbr.rel (0) target = $region5
    $region4: #{tpu_custom_call.1} parent=1 // pred_region
      %s13 = sadd.s32 0, 0
      %s15 = ssub.s32 64, 64
      %16 = vsyncadd [#allocation4], %s15
      %s17 = smul.addr %s13, 64
      %s18 = scalar_lea.hbm %s0, %s17
      %s20 = sshll.u32 [#allocation3], 4
      %s21 = int_to_ptr.vmem [resolvable:$true] %s20
      %23 = dma.hbm_to_vmem [thread:$0]  %s18, 64, %s21, [#allocation4]
    $region5: #{tpu_custom_call.1} parent=1 // pred_fallthru
      _
    // Predicated region
    $region6: #{tpu_custom_call.1} parent=1 // pred_check
      _
    $region7: #{tpu_custom_call.1} parent=1 // pred_check_branch
      %25 = sbr.rel (0) target = $region9
    $region8: #{tpu_custom_call.1} parent=1 // pred_region
      %s26 = sadd.s32 0, 0
      %s28 = ssub.s32 64, 64
      %29 = vsyncadd [#allocation7], %s28
      %s30 = smul.addr %s26, 64
      %s31 = scalar_lea.hbm %s1, %s30
      %s33 = sshll.u32 [#allocation6], 4
      %s34 = int_to_ptr.vmem [resolvable:$true] %s33
      %36 = dma.hbm_to_vmem [thread:$0]  %s31, 64, %s34, [#allocation7]
    $region9: #{tpu_custom_call.1} parent=1 // pred_fallthru
      _
    // Predicated region
    $region10: #{tpu_custom_call.1} parent=1 // pred_check
      _
    $region11: #{tpu_custom_call.1} parent=1 // pred_check_branch
      %38 = sbr.rel (0) target = $region13
    $region12: #{tpu_custom_call.1} parent=1 // pred_region
      %s39 = sadd.s32 0, 0
      %s41 = ssub.s32 64, 64
      %42 = vsyncadd [#allocation7], %s41
      %s43 = smul.addr %s39, 64
      %s44 = scalar_lea.hbm %s2, %s43
      %s46 = sshll.u32 [#allocation8], 4
      %s47 = int_to_ptr.vmem [resolvable:$true] %s46
      %49 = dma.hbm_to_vmem [thread:$0]  %s44, 64, %s47, [#allocation7]
    $region13: #{tpu_custom_call.1} parent=1 // pred_fallthru
      _
    // Predicated region
    $region14: #{tpu_custom_call.1} parent=1 // pred_check
      _
    $region15: #{tpu_custom_call.1} parent=1 // pred_check_branch
      %51 = sbr.rel (0) target = $region17
    $region16: #{tpu_custom_call.1} parent=1 // pred_region
      %52 = dma.done [#allocation4], 64
    $region17: #{tpu_custom_call.1} parent=1 // pred_fallthru
      _
    // Predicated region
    $region18: #{tpu_custom_call.1} parent=1 // pred_check
      _
    $region19: #{tpu_custom_call.1} parent=1 // pred_check_branch
      %54 = sbr.rel (0) target = $region21
    $region20: #{tpu_custom_call.1} parent=1 // pred_region
      %55 = dma.done [#allocation7], 64
    $region21: #{tpu_custom_call.1} parent=1 // pred_fallthru
      _
    // Predicated region
    $region22: #{tpu_custom_call.1} parent=1 // pred_check
      _
    $region23: #{tpu_custom_call.1} parent=1 // pred_check_branch
      %57 = sbr.rel (0) target = $region25
    $region24: #{tpu_custom_call.1} parent=1 // pred_region
      %58 = dma.done [#allocation7], 64
    $region25: #{tpu_custom_call.1} parent=1 // pred_fallthru
      _
    %s59 = sadd.s32 0, 0
    %s60 = sadd.s32 0, 0
    %s61 = sadd.s32 0, 0
    %p62 = scmp.eq.s32.totalorder 0, 0
    %p63 = scmp.eq.s32.totalorder 0, 0
    %p64 = pnand %p62, %p63
    %p65 = pneg %p64
    // Predicated region
    $region26: #{tpu_custom_call.1} parent=1 // pred_check
      _
    $region27: #{tpu_custom_call.1} parent=1 // pred_check_branch
      %67 = sbr.rel (%p64) target = $region29
    $region28: #{tpu_custom_call.1} parent=1 // pred_region
      %68 = vst [vmem:[#allocation2] sm:$0xf] 0.0
    $region29: #{tpu_custom_call.1} parent=1 // pred_fallthru
      _
    %v69 = vld [vmem:[#allocation3] sm:$0xf]
    %v70 = vld [vmem:[#allocation6] sm:$0xf]
    %v71 = vld [vmem:[#allocation8] sm:$0xf]
    %v72 = vsub.f32 %v69, %v70
    %v73 = vand.u32 2147483647, %v72
    %v74 = vand.u32 2147483647, %v69
    %v75 = vand.u32 2147483647, %v70
    %v76 = vadd.f32 %v74, %v75
    %vm77 = vcmp.eq.f32.partialorder %v76, 0.0
    %v78 = vsel %vm77, 1.0, %v76
    %v79 = vrcp.pop %v78
    %v80 = vmul.f32 %v78, %v79
    %v81 = vsub.f32 2.0, %v80
    %v82 = vmul.f32 %v79, %v81
    %v83 = vmul.f32 %v73, %v82
    %vm84 = vcmp.lt.f32.partialorder %v83, inf
    %v85 = vsel %vm84, %v83, 0.0
    %v86 = vmul.f32 %v85, %v71
    %v87 = vld [vmem:[#allocation2] sm:$0xf]
    %v88 = vadd.f32 %v87, %v86
    %89 = vst [vmem:[#allocation2] sm:$0xf] %v88
    // Predicated region
    $region30: #{tpu_custom_call.1} parent=1 // pred_check
      _
    $region31: #{tpu_custom_call.1} parent=1 // pred_check_branch
      %91 = sbr.rel (%p64) target = $region33
    $region32: #{tpu_custom_call.1} parent=1 // pred_region
      %v92 = vld [vmem:[#allocation2] sm:$0xf]
      %vm93 = vcmask 1043456
      %v94 = vsel %vm93, %v92, 0.0
      %95 = vadd.xlane.f32.xlu0 %v94
      %v96 = vpop.xlane.xlu0 %95
      %v97 = vrot.slane %v96, 4
      %v98 = vadd.f32 %v96, %v97
      %v99 = vrot.slane %v98, 2
      %v100 = vadd.f32 %v98, %v99
      %v101 = vrot.slane %v100, 1
      %v102 = vadd.f32 %v100, %v101
      %s103 = vtos %v102
      %v104 = vstv %s103
      %vm105 = vcmask 0
      %106 = vst.msk [vmem:[#allocation9] sm:$0x1] %vm105, %v104
    $region33: #{tpu_custom_call.1} parent=1 // pred_fallthru
      _
    // Predicated region
    $region34: #{tpu_custom_call.1} parent=1 // pred_check
      _
    $region35: #{tpu_custom_call.1} parent=1 // pred_check_branch
      %108 = sbr.rel (0) target = $region37
    $region36: #{tpu_custom_call.1} parent=1 // pred_region
      %s110 = ssub.s32 16, 16
      %111 = vsyncadd [#allocation5], %s110
      %s113 = sshll.u32 [#allocation9], 4
      %s114 = int_to_ptr.vmem [resolvable:$true] %s113
      %116 = dma.vmem_to_hbm [thread:$0]  %s114, 16, %s3, [#allocation5]
    $region37: #{tpu_custom_call.1} parent=1 // pred_fallthru
      _
    // Predicated region
    $region38: #{tpu_custom_call.1} parent=1 // pred_check
      _
    $region39: #{tpu_custom_call.1} parent=1 // pred_check_branch
      %118 = sbr.rel (0) target = $region41
    $region40: #{tpu_custom_call.1} parent=1 // pred_region
      %119 = dma.done [#allocation5], 16
    $region41: #{tpu_custom_call.1} parent=1 // pred_fallthru
      _
    %120 = vsyncpa [#allocation4], 1
    %121 = vsyncpa [#allocation7], 1
    %122 = vsyncpa [#allocation5], 1

</llo_original>
